<compile_context>
chip_gen: v6e
topology: v6e:2x2x1
jax: 0.10.0
libtpu: 0.0.40
codegen_flags: <defaults>
</compile_context>

<pallas_src>
import functools

import numpy as np

import jax
import jax.numpy as jnp
from jax import lax
from jax.experimental import pallas as pl
from jax.experimental.pallas import tpu as pltpu

EPS = 1e-5


def _round_up(x, m):
    return (x + m - 1) // m * m


def _fused_deconv_bn_relu_kernel(p_ref, w_ref, gamma_ref, beta_ref, pool_ref,
                                 o_ref, sum_sc, sq_sc, scale_sc, shift_sc,
                                 *, inv_count):
    """2-pass fused kernel.

    grid = (2, num_tiles):
      pass 0: y = P_tile @ W, accumulate per-column sum / sum-of-squares.
      pass 1: recompute y, apply batch-norm affine + ReLU, store bf16 output.
    """
    s = pl.program_id(0)   # pass id
    i = pl.program_id(1)   # row-tile id

    # Shared work for both passes: (tile_m, Pcols) linear deconv output.
    y = jnp.dot(p_ref[...], w_ref[...], preferred_element_type=jnp.float32)

    @pl.when(jnp.logical_and(s == 0, i == 0))
    def _init():
        sum_sc[...] = jnp.zeros_like(sum_sc)
        sq_sc[...] = jnp.zeros_like(sq_sc)

    @pl.when(s == 0)
    def _stats():
        sum_sc[...] += jnp.sum(y, axis=0, keepdims=True)
        sq_sc[...] += jnp.sum(y * y, axis=0, keepdims=True)

    @pl.when(jnp.logical_and(s == 1, i == 0))
    def _finalize_stats():
        # Pool the 4 sub-pixel phase groups per channel and broadcast the
        # channel totals back across groups in one tiny MXU matmul.
        tot = jnp.dot(sum_sc[...], pool_ref[...],
                      preferred_element_type=jnp.float32)
        tot_sq = jnp.dot(sq_sc[...], pool_ref[...],
                         preferred_element_type=jnp.float32)
        mean = tot * inv_count
        var = jnp.maximum(tot_sq * inv_count - mean * mean, 0.0)
        inv_std = lax.rsqrt(var + EPS)
        scale = gamma_ref[...] * inv_std
        scale_sc[...] = scale
        shift_sc[...] = beta_ref[...] - mean * scale

    @pl.when(s == 1)
    def _normalize():
        o_ref[...] = jnp.maximum(
            y * scale_sc[...] + shift_sc[...], 0.0).astype(o_ref.dtype)


def _phase_selection_tensor(C_out_unused=None, K=4):
    """sel[tap, g, kh, kw] = 1 iff kernel tap (kh,kw) feeds phase g at offset tap."""
    sel = np.zeros((9, 4, K, K), np.float32)
    for a in range(2):
        for bp in range(2):
            g = 2 * a + bp
            for dh in range(3):
                kh = a + 3 - 2 * dh
                if not 0 <= kh < K:
                    continue
                for dw in range(3):
                    kw = bp + 3 - 2 * dw
                    if not 0 <= kw < K:
                        continue
                    sel[3 * dh + dw, g, kh, kw] = 1.0
    return sel


def deconv_block_forward(x, w, b, gamma, beta, *, stride=2, padding=1,
                         tile_m=1024):
    """x: (N, C_in, H, W) NCHW.  w: (C_in, C_out, K, K) (ConvTranspose2d layout).

    `b` is accepted for API parity but unused: with BatchNorm enabled the conv
    bias cancels exactly (mean shifts by b, variance is shift-invariant).
    """
    del b
    N, C_in, H, W = x.shape
    _, C_out, K, _ = w.shape
    assert K == 4 and stride == 2 and padding == 1, \
        "phase decomposition below assumes kernel_size=4, stride=2, padding=1"
    H_out, W_out = 2 * H, 2 * W

    # -------------------------------------------------------------- XLA glue
    # Sub-pixel phase decomposition:
    #   out[n, co, 2m+a, 2l+b] = sum_{ci,dh,dw} x_pad[n,ci,m+dh,l+dw]
    #                                          * w[ci, co, a+3-2dh, b+3-2dw]
    # (kernel indices outside [0,4) are structural zeros).  All 4 phases share
    # one 3x3 tap gather of the *un-upsampled* input and are folded into the
    # output column axis -> a single lane-dense matmul.
    cdt = jnp.bfloat16
    x_pad = jnp.pad(x.astype(cdt), ((0, 0), (0, 0), (1, 1), (1, 1)))
    taps = [x_pad[:, :, dh:dh + H, dw:dw + W]
            for dh in range(3) for dw in range(3)]          # 9 x (N,C_in,H,W)
    pat = jnp.stack(taps, axis=-1)                          # (N,C_in,H,W,9)
    pat = pat.transpose(0, 2, 3, 4, 1)                      # (N,H,W,9,C_in)
    Kdim = 9 * C_in
    M = N * H * W
    P = pat.reshape(M, Kdim)
    # TODO(synk): build the 3x3 tap gather lazily inside the kernel (shifted
    # windows on a channel-last x) instead of materializing P in HBM.

    # Phase-folded weight matrix: rows (tap = dh*3+dw, ci), cols (g = 2a+b, co),
    # zero-padded on the column axis up to a lane-dense multiple of 128.
    ncols = 4 * C_out
    Pcols = max(128, _round_up(ncols, 128))
    sel = jnp.asarray(_phase_selection_tensor(K=K))          # (9,4,K,K) const
    Wcore = jnp.einsum('tgkl,iokl->tigo', sel,
                       w.astype(jnp.float32)).reshape(Kdim, ncols)
    Wmat = jnp.pad(Wcore, ((0, 0), (0, Pcols - ncols))).astype(cdt)

    # Per-column gamma/beta (tiled over the 4 phase groups, zero padded).
    gamma_full = jnp.pad(jnp.tile(gamma.astype(jnp.float32), 4),
                         (0, Pcols - ncols))[None, :]
    beta_full = jnp.pad(jnp.tile(beta.astype(jnp.float32), 4),
                        (0, Pcols - ncols))[None, :]

    # Pooling matrix: (A @ pool)[0, j] = sum over the 4 phase groups of
    # channel j % C_out (padded columns hold zeros in A, and padded gamma/beta
    # are zero, so padded outputs stay zero).  Compile-time constant.
    col = np.arange(Pcols)
    pool = jnp.asarray(
        (col[:, None] % C_out == col[None, :] % C_out).astype(np.float32))

    # Pad rows to a tile multiple.  Zero patch rows produce y == 0 (no bias),
    # so they contribute nothing to the batch statistics.
    tile_m = _round_up(min(tile_m, _round_up(M, 8)), 8)
    M_pad = _round_up(M, tile_m)
    if M_pad != M:
        P = jnp.pad(P, ((0, M_pad - M), (0, 0)))
    num_tiles = M_pad // tile_m

    inv_count = 1.0 / float(N * H_out * W_out)
    kernel = functools.partial(_fused_deconv_bn_relu_kernel,
                               inv_count=inv_count)

    # NOTE: the fused 2-pass design requires sequential ("arbitrary") grid
    # axes (VMEM-resident stats carried across tiles), trading v7x megacore
    # sharding for eliminating the y_lin HBM round trip.  For production Kdim,
    # add a K grid axis / raise vmem_limit_bytes.
    y = pl.pallas_call(
        kernel,
        out_shape=jax.ShapeDtypeStruct((M_pad, Pcols), cdt),
        grid_spec=pltpu.PrefetchScalarGridSpec(
            num_scalar_prefetch=0,
            grid=(2, num_tiles),                 # pass 0: stats, pass 1: write
            in_specs=[
                pl.BlockSpec((tile_m, Kdim), lambda s, i: (i, 0)),
                pl.BlockSpec((Kdim, Pcols), lambda s, i: (0, 0)),
                pl.BlockSpec((1, Pcols), lambda s, i: (0, 0)),
                pl.BlockSpec((1, Pcols), lambda s, i: (0, 0)),
                pl.BlockSpec((Pcols, Pcols), lambda s, i: (0, 0)),
            ],
            # Pass 0 parks the output window on block 0 (never written, never
            # flushed); pass 1 streams each output block exactly once.
            out_specs=pl.BlockSpec((tile_m, Pcols), lambda s, i: (i * s, 0)),
            scratch_shapes=[
                pltpu.VMEM((1, Pcols), jnp.float32),   # sum
                pltpu.VMEM((1, Pcols), jnp.float32),   # sum of squares
                pltpu.VMEM((1, Pcols), jnp.float32),   # scale
                pltpu.VMEM((1, Pcols), jnp.float32),   # shift
            ]),
        compiler_params=pltpu.CompilerParams(
            dimension_semantics=("arbitrary", "arbitrary")),
    )(P, Wmat, gamma_full, beta_full, pool)

    # ---------------------------------------------------- XLA de-interleave
    # Columns are (g = 2a+b, co); de-interleave to NCHW in bf16, cast last.
    # TODO(synk): emit a channel-last / pixel-shuffled layout straight from the
    # kernel's out_spec to avoid this extra HBM pass when NCHW is mandatory.
    y = y[:M, :ncols].reshape(N, H, W, 2, 2, C_out)
    out = y.transpose(0, 5, 1, 3, 2, 4).reshape(N, C_out, H_out, W_out)
    return out.astype(jnp.float32)


def deconv_block_reference(x, w, b, gamma, beta, *, stride=2, padding=1):
    """Pure-JAX f32 reference matching PyTorch DeconvBlock (train-mode BN)."""
    _, C_out, K, _ = w.shape
    w_oihw = jnp.transpose(w, (1, 0, 2, 3))[:, :, ::-1, ::-1]
    pad = K - 1 - padding
    y = lax.conv_general_dilated(
        x, w_oihw, window_strides=(1, 1),
        padding=((pad, pad), (pad, pad)),
        lhs_dilation=(stride, stride),
        dimension_numbers=('NCHW', 'OIHW', 'NCHW'))
    y = y + b[None, :, None, None]
    mean = y.mean(axis=(0, 2, 3), keepdims=True)
    var = y.var(axis=(0, 2, 3), keepdims=True)    # biased, like PyTorch BN fwd
    yhat = (y - mean) / jnp.sqrt(var + EPS)
    yhat = yhat * gamma[None, :, None, None] + beta[None, :, None, None]
    return jnp.maximum(yhat, 0.0)


if __name__ == "__main__":
    key = jax.random.PRNGKey(0)
    k_x, k_w, k_b, k_g, k_be = jax.random.split(key, 5)

    N, C_in, H, W = 2, 4, 16, 16
    C_out, K = 8, 4

    x = jax.random.normal(k_x, (N, C_in, H, W), jnp.float32)
    w = jax.random.normal(k_w, (C_in, C_out, K, K), jnp.float32) * 0.1
    b = jax.random.normal(k_b, (C_out,), jnp.float32) * 0.1
    gamma = 1.0 + 0.1 * jax.random.normal(k_g, (C_out,), jnp.float32)
    beta = 0.1 * jax.random.normal(k_be, (C_out,), jnp.float32)

    # Small tile_m so the tiny demo exercises the multi-tile accumulation path;
    # production sizes should use the default tile_m ~ 1024.
    fwd = jax.jit(functools.partial(deconv_block_forward, tile_m=128))
    out = fwd(x, w, b, gamma, beta)
    out = jax.block_until_ready(out)

    ref = deconv_block_reference(x, w, b, gamma, beta)
    assert out.shape == (N, C_out, 2 * H, 2 * W), out.shape
    err = jnp.max(jnp.abs(out - ref))
    # bf16 matmul operands + bf16 output store -> bf16-level tolerance vs f32 ref.
    assert jnp.allclose(out, ref, atol=5e-2, rtol=5e-2), f"max abs err {err}"

    print("KERNEL_OK")
</pallas_src>

<mosaic_0001>
module attributes {stable_mosaic.version = 11 : i64} {
  func.func @_fused_deconv_bn_relu_kernel(%arg0: i32, %arg1: i32, %arg2: memref<128x36xbf16, #tpu.memory_space<vmem>>, %arg3: memref<36x128xbf16, #tpu.memory_space<vmem>>, %arg4: memref<1x128xf32, #tpu.memory_space<vmem>>, %arg5: memref<1x128xf32, #tpu.memory_space<vmem>>, %arg6: memref<128x128xf32, #tpu.memory_space<vmem>>, %arg7: memref<128x128xbf16, #tpu.memory_space<vmem>>, %arg8: memref<1x128xf32, #tpu.memory_space<vmem>>, %arg9: memref<1x128xf32, #tpu.memory_space<vmem>>, %arg10: memref<1x128xf32, #tpu.memory_space<vmem>>, %arg11: memref<1x128xf32, #tpu.memory_space<vmem>>) attributes {dimension_semantics = [#tpu.dimension_semantics<arbitrary>, #tpu.dimension_semantics<arbitrary>], iteration_bounds = array<i64: 2, 4>, scalar_prefetch = 0 : i64, scratch_operands = 4 : i64, tpu.core_type = #tpu.core_type<tc>, window_params = [{transform_indices = @transform_0, window_bounds = array<i64: 128, 36>}, {pipeline_mode = #tpu.pipeline_mode<synchronous>, transform_indices = @transform_1, window_bounds = array<i64: 36, 128>}, {pipeline_mode = #tpu.pipeline_mode<synchronous>, transform_indices = @transform_2, window_bounds = array<i64: 1, 128>}, {pipeline_mode = #tpu.pipeline_mode<synchronous>, transform_indices = @transform_3, window_bounds = array<i64: 1, 128>}, {pipeline_mode = #tpu.pipeline_mode<synchronous>, transform_indices = @transform_4, window_bounds = array<i64: 128, 128>}, {transform_indices = @transform_5, window_bounds = array<i64: 128, 128>}]} {
    %c0 = arith.constant 0 : index
    %c0_0 = arith.constant 0 : index
    %0 = vector.load %arg2[%c0, %c0_0] : memref<128x36xbf16, #tpu.memory_space<vmem>>, vector<128x36xbf16>
    %c0_1 = arith.constant 0 : index
    %c0_2 = arith.constant 0 : index
    %1 = vector.load %arg3[%c0_1, %c0_2] : memref<36x128xbf16, #tpu.memory_space<vmem>>, vector<36x128xbf16>
    %cst = arith.constant dense<0.000000e+00> : vector<128x128xf32>
    %2 = tpu.matmul %0, %1, %cst {dimension_numbers = #tpu.dot_dimension_numbers<[1], [0], [0], [1], [0, 0, 1, 1], [], []>} : vector<128x36xbf16>, vector<36x128xbf16>, vector<128x128xf32> -> vector<128x128xf32>
    %c0_i32 = arith.constant 0 : i32
    %3 = arith.cmpi eq, %arg0, %c0_i32 : i32
    %c0_i32_3 = arith.constant 0 : i32
    %4 = arith.cmpi eq, %arg1, %c0_i32_3 : i32
    %5 = arith.andi %3, %4 : i1
    %6 = arith.extui %5 : i1 to i32
    %c0_i32_4 = arith.constant 0 : i32
    %7 = arith.cmpi ne, %6, %c0_i32_4 : i32
    scf.if %7 {
      %cst_11 = arith.constant 0.000000e+00 : f32
      %19 = vector.broadcast %cst_11 : f32 to vector<1x128xf32>
      %c0_12 = arith.constant 0 : index
      %c0_13 = arith.constant 0 : index
      %20 = vector.load %arg8[%c0_12, %c0_13] : memref<1x128xf32, #tpu.memory_space<vmem>>, vector<1x128xf32>
      tpu.vector_store %arg8[%c0_12, %c0_13], %19 {strides = array<i32>} : memref<1x128xf32, #tpu.memory_space<vmem>>, vector<1x128xf32>,
      %cst_14 = arith.constant 0.000000e+00 : f32
      %21 = vector.broadcast %cst_14 : f32 to vector<1x128xf32>
      %c0_15 = arith.constant 0 : index
      %c0_16 = arith.constant 0 : index
      %22 = vector.load %arg9[%c0_15, %c0_16] : memref<1x128xf32, #tpu.memory_space<vmem>>, vector<1x128xf32>
      tpu.vector_store %arg9[%c0_15, %c0_16], %21 {strides = array<i32>} : memref<1x128xf32, #tpu.memory_space<vmem>>, vector<1x128xf32>,
    } else {
    }
    %c0_i32_5 = arith.constant 0 : i32
    %8 = arith.cmpi eq, %arg0, %c0_i32_5 : i32
    %9 = arith.extui %8 : i1 to i32
    %c0_i32_6 = arith.constant 0 : i32
    %10 = arith.cmpi ne, %9, %c0_i32_6 : i32
    scf.if %10 {
      %c0_11 = arith.constant 0 : index
      %c0_12 = arith.constant 0 : index
      %19 = vector.load %arg8[%c0_11, %c0_12] : memref<1x128xf32, #tpu.memory_space<vmem>>, vector<1x128xf32>
      %cst_13 = arith.constant dense<0.000000e+00> : vector<128xf32>
      %20 = vector.multi_reduction <add>, %2, %cst_13 [0] : vector<128x128xf32> to vector<128xf32>
      %21 = vector.shape_cast %20 : vector<128xf32> to vector<1x128xf32>
      %22 = arith.addf %19, %21 : vector<1x128xf32>
      %c0_14 = arith.constant 0 : index
      %c0_15 = arith.constant 0 : index
      %23 = vector.load %arg8[%c0_14, %c0_15] : memref<1x128xf32, #tpu.memory_space<vmem>>, vector<1x128xf32>
      tpu.vector_store %arg8[%c0_14, %c0_15], %22 {strides = array<i32>} : memref<1x128xf32, #tpu.memory_space<vmem>>, vector<1x128xf32>,
      %c0_16 = arith.constant 0 : index
      %c0_17 = arith.constant 0 : index
      %24 = vector.load %arg9[%c0_16, %c0_17] : memref<1x128xf32, #tpu.memory_space<vmem>>, vector<1x128xf32>
      %25 = arith.mulf %2, %2 : vector<128x128xf32>
      %cst_18 = arith.constant dense<0.000000e+00> : vector<128xf32>
      %26 = vector.multi_reduction <add>, %25, %cst_18 [0] : vector<128x128xf32> to vector<128xf32>
      %27 = vector.shape_cast %26 : vector<128xf32> to vector<1x128xf32>
      %28 = arith.addf %24, %27 : vector<1x128xf32>
      %c0_19 = arith.constant 0 : index
      %c0_20 = arith.constant 0 : index
      %29 = vector.load %arg9[%c0_19, %c0_20] : memref<1x128xf32, #tpu.memory_space<vmem>>, vector<1x128xf32>
      tpu.vector_store %arg9[%c0_19, %c0_20], %28 {strides = array<i32>} : memref<1x128xf32, #tpu.memory_space<vmem>>, vector<1x128xf32>,
    } else {
    }
    %c1_i32 = arith.constant 1 : i32
    %11 = arith.cmpi eq, %arg0, %c1_i32 : i32
    %c0_i32_7 = arith.constant 0 : i32
    %12 = arith.cmpi eq, %arg1, %c0_i32_7 : i32
    %13 = arith.andi %11, %12 : i1
    %14 = arith.extui %13 : i1 to i32
    %c0_i32_8 = arith.constant 0 : i32
    %15 = arith.cmpi ne, %14, %c0_i32_8 : i32
    scf.if %15 {
      %c0_11 = arith.constant 0 : index
      %c0_12 = arith.constant 0 : index
      %19 = vector.load %arg8[%c0_11, %c0_12] : memref<1x128xf32, #tpu.memory_space<vmem>>, vector<1x128xf32>
      %c0_13 = arith.constant 0 : index
      %c0_14 = arith.constant 0 : index
      %20 = vector.load %arg6[%c0_13, %c0_14] : memref<128x128xf32, #tpu.memory_space<vmem>>, vector<128x128xf32>
      %cst_15 = arith.constant dense<0.000000e+00> : vector<1x128xf32>
      %21 = tpu.matmul %19, %20, %cst_15 {dimension_numbers = #tpu.dot_dimension_numbers<[1], [0], [0], [1], [0, 0, 1, 1], [], []>} : vector<1x128xf32>, vector<128x128xf32>, vector<1x128xf32> -> vector<1x128xf32>
      %c0_16 = arith.constant 0 : index
      %c0_17 = arith.constant 0 : index
      %22 = vector.load %arg9[%c0_16, %c0_17] : memref<1x128xf32, #tpu.memory_space<vmem>>, vector<1x128xf32>
      %c0_18 = arith.constant 0 : index
      %c0_19 = arith.constant 0 : index
      %23 = vector.load %arg6[%c0_18, %c0_19] : memref<128x128xf32, #tpu.memory_space<vmem>>, vector<128x128xf32>
      %cst_20 = arith.constant dense<0.000000e+00> : vector<1x128xf32>
      %24 = tpu.matmul %22, %23, %cst_20 {dimension_numbers = #tpu.dot_dimension_numbers<[1], [0], [0], [1], [0, 0, 1, 1], [], []>} : vector<1x128xf32>, vector<128x128xf32>, vector<1x128xf32> -> vector<1x128xf32>
      %cst_21 = arith.constant 4.8828125E-4 : f32
      %25 = vector.broadcast %cst_21 : f32 to vector<1x128xf32>
      %26 = arith.mulf %21, %25 : vector<1x128xf32>
      %cst_22 = arith.constant 4.8828125E-4 : f32
      %27 = vector.broadcast %cst_22 : f32 to vector<1x128xf32>
      %28 = arith.mulf %24, %27 : vector<1x128xf32>
      %29 = arith.mulf %26, %26 : vector<1x128xf32>
      %30 = arith.subf %28, %29 : vector<1x128xf32>
      %cst_23 = arith.constant 0.000000e+00 : f32
      %31 = vector.broadcast %cst_23 : f32 to vector<1x128xf32>
      %32 = arith.maximumf %30, %31 : vector<1x128xf32>
      %cst_24 = arith.constant 9.99999974E-6 : f32
      %33 = vector.broadcast %cst_24 : f32 to vector<1x128xf32>
      %34 = arith.addf %32, %33 : vector<1x128xf32>
      %35 = math.rsqrt %34 : vector<1x128xf32>
      %c0_25 = arith.constant 0 : index
      %c0_26 = arith.constant 0 : index
      %36 = vector.load %arg4[%c0_25, %c0_26] : memref<1x128xf32, #tpu.memory_space<vmem>>, vector<1x128xf32>
      %37 = arith.mulf %36, %35 : vector<1x128xf32>
      %c0_27 = arith.constant 0 : index
      %c0_28 = arith.constant 0 : index
      %38 = vector.load %arg10[%c0_27, %c0_28] : memref<1x128xf32, #tpu.memory_space<vmem>>, vector<1x128xf32>
      tpu.vector_store %arg10[%c0_27, %c0_28], %37 {strides = array<i32>} : memref<1x128xf32, #tpu.memory_space<vmem>>, vector<1x128xf32>,
      %c0_29 = arith.constant 0 : index
      %c0_30 = arith.constant 0 : index
      %39 = vector.load %arg5[%c0_29, %c0_30] : memref<1x128xf32, #tpu.memory_space<vmem>>, vector<1x128xf32>
      %40 = arith.mulf %26, %37 : vector<1x128xf32>
      %41 = arith.subf %39, %40 : vector<1x128xf32>
      %c0_31 = arith.constant 0 : index
      %c0_32 = arith.constant 0 : index
      %42 = vector.load %arg11[%c0_31, %c0_32] : memref<1x128xf32, #tpu.memory_space<vmem>>, vector<1x128xf32>
      tpu.vector_store %arg11[%c0_31, %c0_32], %41 {strides = array<i32>} : memref<1x128xf32, #tpu.memory_space<vmem>>, vector<1x128xf32>,
    } else {
    }
    %c1_i32_9 = arith.constant 1 : i32
    %16 = arith.cmpi eq, %arg0, %c1_i32_9 : i32
    %17 = arith.extui %16 : i1 to i32
    %c0_i32_10 = arith.constant 0 : i32
    %18 = arith.cmpi ne, %17, %c0_i32_10 : i32
    scf.if %18 {
      %c0_11 = arith.constant 0 : index
      %c0_12 = arith.constant 0 : index
      %19 = vector.load %arg10[%c0_11, %c0_12] : memref<1x128xf32, #tpu.memory_space<vmem>>, vector<1x128xf32>
      %20 = vector.broadcast %19 : vector<1x128xf32> to vector<128x128xf32>
      %21 = arith.mulf %2, %20 : vector<128x128xf32>
      %c0_13 = arith.constant 0 : index
      %c0_14 = arith.constant 0 : index
      %22 = vector.load %arg11[%c0_13, %c0_14] : memref<1x128xf32, #tpu.memory_space<vmem>>, vector<1x128xf32>
      %23 = vector.broadcast %22 : vector<1x128xf32> to vector<128x128xf32>
      %24 = arith.addf %21, %23 : vector<128x128xf32>
      %cst_15 = arith.constant 0.000000e+00 : f32
      %25 = vector.broadcast %cst_15 : f32 to vector<128x128xf32>
      %26 = arith.maximumf %24, %25 : vector<128x128xf32>
      %27 = arith.truncf %26 : vector<128x128xf32> to vector<128x128xbf16>
      %c0_16 = arith.constant 0 : index
      %c0_17 = arith.constant 0 : index
      %28 = vector.load %arg7[%c0_16, %c0_17] : memref<128x128xbf16, #tpu.memory_space<vmem>>, vector<128x128xbf16>
      tpu.vector_store %arg7[%c0_16, %c0_17], %27 {strides = array<i32>} : memref<128x128xbf16, #tpu.memory_space<vmem>>, vector<128x128xbf16>,
    } else {
    }
    return
  }
  func.func @transform_0(%arg0: i32, %arg1: i32) -> (i32, i32) {
    %c0_i32 = arith.constant 0 : i32
    %c0_i32_0 = arith.constant 0 : i32
    return %arg1, %c0_i32 : i32, i32
  }
  func.func @transform_1(%arg0: i32, %arg1: i32) -> (i32, i32) {
    %c0_i32 = arith.constant 0 : i32
    %c0_i32_0 = arith.constant 0 : i32
    %c0_i32_1 = arith.constant 0 : i32
    return %c0_i32, %c0_i32_0 : i32, i32
  }
  func.func @transform_2(%arg0: i32, %arg1: i32) -> (i32, i32) {
    %c0_i32 = arith.constant 0 : i32
    %c0_i32_0 = arith.constant 0 : i32
    %c0_i32_1 = arith.constant 0 : i32
    return %c0_i32, %c0_i32_0 : i32, i32
  }
  func.func @transform_3(%arg0: i32, %arg1: i32) -> (i32, i32) {
    %c0_i32 = arith.constant 0 : i32
    %c0_i32_0 = arith.constant 0 : i32
    %c0_i32_1 = arith.constant 0 : i32
    return %c0_i32, %c0_i32_0 : i32, i32
  }
  func.func @transform_4(%arg0: i32, %arg1: i32) -> (i32, i32) {
    %c0_i32 = arith.constant 0 : i32
    %c0_i32_0 = arith.constant 0 : i32
    %c0_i32_1 = arith.constant 0 : i32
    return %c0_i32, %c0_i32_0 : i32, i32
  }
  func.func @transform_5(%arg0: i32, %arg1: i32) -> (i32, i32) {
    %0 = arith.muli %arg1, %arg0 : i32
    %c0_i32 = arith.constant 0 : i32
    %c0_i32_0 = arith.constant 0 : i32
    return %0, %c0_i32 : i32, i32
  }
}

</mosaic_0001>

<llo_original>
// kernel: tile.14
$region0: #{tile.14}
  %s0 = inlined_call_operand.vmem [shape: f32[4,8], index: 0, kind: input, shape index: {}]
  %s1 = inlined_call_operand.vmem [shape: f32[32], index: 1, kind: output, shape index: {}]
  $region1: #{tile.14} parent=0
    #allocation0 [shape = 'u8[4096]{0}', space=vmem, size = 0x1000, scoped, tag = 'scoped mem for output reshape']
    #allocation1 [shape = 'u8[4096]{0}', space=vmem, size = 0x1000, scoped, tag = 'scoped mem for input reshape']
    %s3 = sshll.u32 1, 4
    %s4 = ssub.s32 %s3, 1
    %v5 = vld [vmem:[%s0] sm:%s4]
    %6 = vst [vmem:[#allocation1] sm:%s4] %v5
    %v7 = vld [vmem:[#allocation1] sm:$0x1]
    %vm8 = vcmask 64512
    %9 = vst.msk [vmem:[#allocation0] sm:$0x1] %vm8, %v7
    %s10 = scalar_lea.vmem [#allocation1], 3
    %v11 = vld [vmem:[%s10] sm:$0x1]
    %12 = vrot.lane.b32.xlu0 %v11, 24
    %v13 = vpop.permute.xlu0 %12
    %vm14 = vcmask 261312
    %15 = vst.msk [vmem:[#allocation0] sm:$0x1] %vm14, %v13
    %s16 = scalar_lea.vmem [#allocation1], 2
    %v17 = vld [vmem:[%s16] sm:$0x1]
    %18 = vrot.lane.b32.xlu0 %v17, 16
    %v19 = vpop.permute.xlu0 %18
    %vm20 = vcmask 195712
    %21 = vst.msk [vmem:[#allocation0] sm:$0x1] %vm20, %v19
    %s22 = scalar_lea.vmem [#allocation1], 1
    %v23 = vld [vmem:[%s22] sm:$0x1]
    %24 = vrot.lane.b32.xlu0 %v23, 8
    %v25 = vpop.permute.xlu0 %24
    %vm26 = vcmask 130112
    %27 = vst.msk [vmem:[#allocation0] sm:$0x1] %vm26, %v25
    %s29 = sshll.u32 1, 1
    %s30 = ssub.s32 %s29, 1
    %v32 = vld [vmem:[#allocation0] sm:%s30]
    %s33 = sshll.u32 1, 1
    %s34 = ssub.s32 %s33, 1
    %35 = vst [vmem:[%s1] sm:%s34] %v32

// kernel: tile.13
$region0: #{tile.13}
  #allocation0 [shape = 's32[1]{0}', space=sflag, size = 0x4, scoped, tag = 'scoped memory for tile.13']
  %s0 = inlined_call_operand.vmem [shape: f32[8], index: 0, kind: input, shape index: {}]
  %s1 = inlined_call_operand.vmem [shape: f32[4,8], index: 1, kind: output, shape index: {}]
  // Predicated region
  $region2: #{tile.13} parent=0 // pred_check
    _
  $region3: #{tile.13} parent=0 // pred_check_branch
    %3 = sbr.rel (0) target = $region5
  $region4: #{tile.13} parent=0 // pred_region
    _
  $region5: #{tile.13} parent=0 // pred_fallthru
    _
  %v4 = vld [vmem:[%s0] ss:$0 sm:$0xff]
  %5 = vst [vmem:[%s1] sm:$0xf] %v4

// kernel: deconv_block_forward.1
$region0: #{deconv_block_forward.1}
  #allocation0 [shape = 'u32[]', space=smem, size = 0x4, offset = 0x4, fixed_abs, tag = 'smem constant byte address 0x4 - core index']
  #allocation1 [shape = 'u32[144,128]{1,0:T(1,128)}', space=vmem, size = 0x12000, scoped, tag = 'internal scratch']
  #allocation2 [shape = 'f32[1,128]{1,0:T(1,128)}', space=vmem, size = 0x200, scoped, tag = 'scratch operand']
  #allocation3 [shape = 'f32[1,128]{1,0:T(1,128)}', space=vmem, size = 0x200, scoped, tag = 'scratch operand']
  #allocation4 [shape = 'f32[1,128]{1,0:T(1,128)}', space=vmem, size = 0x200, scoped, tag = 'scratch operand']
  #allocation5 [shape = 'f32[1,128]{1,0:T(1,128)}', space=vmem, size = 0x200, scoped, tag = 'scratch operand']
  %s0 = inlined_call_operand.vmem [shape: bf16[512,36], index: 0, kind: input, shape index: {}]
  %s1 = inlined_call_operand.vmem [shape: bf16[36,128], index: 1, kind: input, shape index: {}]
  %s2 = inlined_call_operand.vmem [shape: f32[1,128], index: 2, kind: input, shape index: {}]
  %s3 = inlined_call_operand.vmem [shape: f32[1,128], index: 3, kind: input, shape index: {}]
  %s4 = inlined_call_operand.vmem [shape: f32[128,128], index: 4, kind: input, shape index: {}]
  %s5 = inlined_call_operand.vmem [shape: bf16[512,128], index: 5, kind: output, shape index: {}]
  %s6 = sld [smem:[#allocation0]]
  $region69: #{deconv_block_forward.1} parent=0
    _
  %s8 = ssub.s32 1, %s6
  %s9 = scalar_select 0, %s8, %s6
  loop: start=0, step=1, limit=10
  $region2: #{deconv_block_forward.1} parent=0 // loop_pre_header
    _
  $region3: #{deconv_block_forward.1} parent=0 // loop_header
    %s11 = sphi 0, %s15
    %p12 = scmp.ge.s32.totalorder %s11, 10
    %s18 = sphi 0, %s30
    %s19 = sphi 0, %s26
    %s20 = sphi 0, %s18
    %s21 = sphi 0, %s19
    %s22 = sphi 0, %s20
    %s23 = sphi 0, %s21
    %s33 = sphi 0, %s35
    %s36 = sphi 0, %s33
    %s37 = sphi 0, %s36
    %s53 = sphi 0, %s37
    %s57 = sphi 0, %s57
    %s59 = sphi 0, %s57
    %s60 = sphi 0, %s59
    %s74 = sphi 0, %s60
    %s78 = sphi 0, %s78
    %s80 = sphi 0, %s78
    %s81 = sphi 0, %s80
    %s95 = sphi 0, %s81
    %s99 = sphi 0, %s99
    %s101 = sphi 0, %s99
    %s102 = sphi 0, %s101
    %s116 = sphi 0, %s102
    %s120 = sphi 0, %s120
    %s122 = sphi 0, %s120
    %s123 = sphi 0, %s122
    %s137 = sphi 0, %s123
    %s145 = sphi 0, %s147
    %s148 = sphi 0, %s145
    %s149 = sphi 0, %s148
    %s165 = sphi 0, %s149
  $region4: #{deconv_block_forward.1} parent=0 // loop_header_branch
    %14 = sbr.rel (%p12) target = $region8
  $region5: #{deconv_block_forward.1} parent=0 // loop_body
    %s16 = ssub.s32 %s11, 1
    %s17 = ssub.s32 %s11, 2
    %s24 = sadd.s32 1, %s19
    %p25 = scmp.ge.s32.totalorder %s24, 4
    %s26 = scalar_select %p25, 0, %s24
    %s27 = sadd.s32 1, %s18
    %s28 = scalar_select %p25, %s27, %s18
    %p29 = scmp.ge.s32.totalorder %s28, 2
    %s30 = scalar_select %p29, 0, %s28
    %s31 = ssub.s32 %s19, %s26
    %p32 = scmp.eq.s32.totalorder %s31, 0
    %s34 = sadd.s32 %s33, 1
    %s35 = scalar_select %p32, %s33, %s34
    %p38 = pneg %p32
    %p39 = scmp.eq.s32.totalorder %s11, 7
    %p40 = por %p38, %p39
    %p41 = scmp.ne.s32.totalorder %s33, %s36
    %p42 = scmp.eq.s32.totalorder %s11, 0
    %p43 = por %p41, %p42
    %p44 = scmp.ne.s32.totalorder %s33, %s36
    %p45 = scmp.eq.s32.totalorder %s16, 7
    %p46 = por %p44, %p45
    %p47 = scmp.ne.s32.totalorder %s36, %s37
    %p48 = scmp.eq.s32.totalorder %s16, 0
    %p49 = por %p47, %p48
    %p50 = scmp.ne.s32.totalorder %s36, %s37
    %p51 = scmp.eq.s32.totalorder %s17, 7
    %p52 = por %p50, %p51
    %p54 = scmp.ne.s32.totalorder %s37, %s53
    %p55 = scmp.eq.s32.totalorder %s17, 0
    %p56 = por %p54, %p55
    %s58 = sadd.s32 %s57, 1
    %p61 = scmp.eq.s32.totalorder %s11, 7
    %p62 = scmp.ne.s32.totalorder %s57, %s59
    %p63 = scmp.eq.s32.totalorder %s11, 0
    %p64 = por %p62, %p63
    %p65 = scmp.ne.s32.totalorder %s57, %s59
    %p66 = scmp.eq.s32.totalorder %s16, 7
    %p67 = por %p65, %p66
    %p68 = scmp.ne.s32.totalorder %s59, %s60
    %p69 = scmp.eq.s32.totalorder %s16, 0
    %p70 = por %p68, %p69
    %p71 = scmp.ne.s32.totalorder %s59, %s60
    %p72 = scmp.eq.s32.totalorder %s17, 7
    %p73 = por %p71, %p72
    %p75 = scmp.ne.s32.totalorder %s60, %s74
    %p76 = scmp.eq.s32.totalorder %s17, 0
    %p77 = por %p75, %p76
    %s79 = sadd.s32 %s78, 1
    %p82 = scmp.eq.s32.totalorder %s11, 7
    %p83 = scmp.ne.s32.totalorder %s78, %s80
    %p84 = scmp.eq.s32.totalorder %s11, 0
    %p85 = por %p83, %p84
    %p86 = scmp.ne.s32.totalorder %s78, %s80
    %p87 = scmp.eq.s32.totalorder %s16, 7
    %p88 = por %p86, %p87
    %p89 = scmp.ne.s32.totalorder %s80, %s81
    %p90 = scmp.eq.s32.totalorder %s16, 0
    %p91 = por %p89, %p90
    %p92 = scmp.ne.s32.totalorder %s80, %s81
    %p93 = scmp.eq.s32.totalorder %s17, 7
    %p94 = por %p92, %p93
    %p96 = scmp.ne.s32.totalorder %s81, %s95
    %p97 = scmp.eq.s32.totalorder %s17, 0
    %p98 = por %p96, %p97
    %s100 = sadd.s32 %s99, 1
    %p103 = scmp.eq.s32.totalorder %s11, 7
    %p104 = scmp.ne.s32.totalorder %s99, %s101
    %p105 = scmp.eq.s32.totalorder %s11, 0
    %p106 = por %p104, %p105
    %p107 = scmp.ne.s32.totalorder %s99, %s101
    %p108 = scmp.eq.s32.totalorder %s16, 7
    %p109 = por %p107, %p108
    %p110 = scmp.ne.s32.totalorder %s101, %s102
    %p111 = scmp.eq.s32.totalorder %s16, 0
    %p112 = por %p110, %p111
    %p113 = scmp.ne.s32.totalorder %s101, %s102
    %p114 = scmp.eq.s32.totalorder %s17, 7
    %p115 = por %p113, %p114
    %p117 = scmp.ne.s32.totalorder %s102, %s116
    %p118 = scmp.eq.s32.totalorder %s17, 0
    %p119 = por %p117, %p118
    %s121 = sadd.s32 %s120, 1
    %p124 = scmp.eq.s32.totalorder %s11, 7
    %p125 = scmp.ne.s32.totalorder %s120, %s122
    %p126 = scmp.eq.s32.totalorder %s11, 0
    %p127 = por %p125, %p126
    %p128 = scmp.ne.s32.totalorder %s120, %s122
    %p129 = scmp.eq.s32.totalorder %s16, 7
    %p130 = por %p128, %p129
    %p131 = scmp.ne.s32.totalorder %s122, %s123
    %p132 = scmp.eq.s32.totalorder %s16, 0
    %p133 = por %p131, %p132
    %p134 = scmp.ne.s32.totalorder %s122, %s123
    %p135 = scmp.eq.s32.totalorder %s17, 7
    %p136 = por %p134, %p135
    %p138 = scmp.ne.s32.totalorder %s123, %s137
    %p139 = scmp.eq.s32.totalorder %s17, 0
    %p140 = por %p138, %p139
    %s141 = smul.u32 %s19, %s18
    %s142 = smul.u32 %s26, %s30
    %s143 = ssub.s32 %s141, %s142
    %p144 = scmp.eq.s32.totalorder %s143, 0
    %s146 = sadd.s32 %s145, 1
    %s147 = scalar_select %p144, %s145, %s146
    %p150 = pneg %p144
    %p151 = scmp.eq.s32.totalorder %s11, 7
    %p152 = por %p150, %p151
    %p153 = scmp.ne.s32.totalorder %s145, %s148
    %p154 = scmp.eq.s32.totalorder %s11, 0
    %p155 = por %p153, %p154
    %p156 = scmp.ne.s32.totalorder %s145, %s148
    %p157 = scmp.eq.s32.totalorder %s16, 7
    %p158 = por %p156, %p157
    %p159 = scmp.ne.s32.totalorder %s148, %s149
    %p160 = scmp.eq.s32.totalorder %s16, 0
    %p161 = por %p159, %p160
    %p162 = scmp.ne.s32.totalorder %s148, %s149
    %p163 = scmp.eq.s32.totalorder %s17, 7
    %p164 = por %p162, %p163
    %p166 = scmp.ne.s32.totalorder %s149, %s165
    %p167 = scmp.eq.s32.totalorder %s17, 0
    %p168 = por %p166, %p167
    %p169 = scmp.le.s32.totalorder 1, %s11
    %p170 = scmp.lt.s32.totalorder %s11, 9
    %p171 = pnand %p169, %p170
    %p172 = pneg %p171
    // Predicated region
    $region9: #{deconv_block_forward.1} parent=5 // pred_check
      _
    $region10: #{deconv_block_forward.1} parent=5 // pred_check_branch
      %174 = sbr.rel (%p171) target = $region12
    $region11: #{deconv_block_forward.1} parent=5 // pred_region
      %s175 = ssub.s32 %s11, 1
      // Predicated region
      $region13: #{deconv_block_forward.1} parent=11 // pred_check
        %p176 = pneg %p70
      $region14: #{deconv_block_forward.1} parent=11 // pred_check_branch
        %178 = sbr.rel (%p176) target = $region16
      $region15: #{deconv_block_forward.1} parent=11 // pred_region
        _
      $region16: #{deconv_block_forward.1} parent=11 // pred_fallthru
        _
      // Predicated region
      $region17: #{deconv_block_forward.1} parent=11 // pred_check
        %p179 = pneg %p91
      $region18: #{deconv_block_forward.1} parent=11 // pred_check_branch
        %181 = sbr.rel (%p179) target = $region20
      $region19: #{deconv_block_forward.1} parent=11 // pred_region
        _
      $region20: #{deconv_block_forward.1} parent=11 // pred_fallthru
        _
      // Predicated region
      $region21: #{deconv_block_forward.1} parent=11 // pred_check
        %p182 = pneg %p112
      $region22: #{deconv_block_forward.1} parent=11 // pred_check_branch
        %184 = sbr.rel (%p182) target = $region24
      $region23: #{deconv_block_forward.1} parent=11 // pred_region
        _
      $region24: #{deconv_block_forward.1} parent=11 // pred_fallthru
        _
      // Predicated region
      $region25: #{deconv_block_forward.1} parent=11 // pred_check
        %p185 = pneg %p133
      $region26: #{deconv_block_forward.1} parent=11 // pred_check_branch
        %187 = sbr.rel (%p185) target = $region28
      $region27: #{deconv_block_forward.1} parent=11 // pred_region
        _
      $region28: #{deconv_block_forward.1} parent=11 // pred_fallthru
        _
    $region12: #{deconv_block_forward.1} parent=5 // pred_fallthru
      _
    %p188 = scmp.lt.s32.totalorder %s11, 8
    // Predicated region
    $region29: #{deconv_block_forward.1} parent=5 // pred_check
      %p189 = pneg %p188
    $region30: #{deconv_block_forward.1} parent=5 // pred_check_branch
      %191 = sbr.rel (%p189) target = $region32
    $region31: #{deconv_block_forward.1} parent=5 // pred_region
      // Predicated region
      $region33: #{deconv_block_forward.1} parent=31 // pred_check
        %p192 = pneg %p43
      $region34: #{deconv_block_forward.1} parent=31 // pred_check_branch
        %194 = sbr.rel (%p192) target = $region36
      $region35: #{deconv_block_forward.1} parent=31 // pred_region
        %s195 = smul.u32 16, %s19
        %p196 = scmp.lt.s32.totalorder %s195, 63
        %s197 = scalar_select %p196, %s195, 63
        %s198 = smul.addr %s197, 4
        %s199 = scalar_lea.vmem %s0, %s198
        %s200 = smul.u32 16, %s19
      $region36: #{deconv_block_forward.1} parent=31 // pred_fallthru
        _
    $region32: #{deconv_block_forward.1} parent=5 // pred_fallthru
      _
    %p201 = scmp.le.s32.totalorder 1, %s11
    %p202 = scmp.lt.s32.totalorder %s11, 9
    %p203 = pnand %p201, %p202
    %p204 = pneg %p203
    // Predicated region
    $region37: #{deconv_block_forward.1} parent=5 // pred_check
      _
    $region38: #{deconv_block_forward.1} parent=5 // pred_check_branch
      %206 = sbr.rel (%p203) target = $region40
    $region39: #{deconv_block_forward.1} parent=5 // pred_region
      %s207 = ssub.s32 %s11, 1
      %s208 = smul.u32 16, %s21
      %p209 = scmp.lt.s32.totalorder %s208, 63
      %s210 = scalar_select %p209, %s208, 63
      %s211 = smul.addr %s210, 4
      %s212 = scalar_lea.vmem %s0, %s211
      %p213 = pneg %p49
      %p214 = pneg %p46
      %p215 = pneg %p70
      %p216 = pneg %p67
      %p217 = pneg %p91
      %p218 = pneg %p88
      %p219 = pneg %p112
      %p220 = pneg %p109
      %p221 = pneg %p133
      %p222 = pneg %p130
      %p223 = pneg %p161
      %p224 = pneg %p158
      %s225 = smul.u32 %s21, %s20
      %s226 = smul.u32 16, %s225
      %p227 = scmp.lt.s32.totalorder %s226, 63
      %s228 = scalar_select %p227, %s226, 63
      %s229 = smul.addr %s228, 4
      %s230 = scalar_lea.vmem %s5, %s229
      %s231 = smul.u32 16, %s21
      %p232 = scmp.lt.s32.totalorder %s231, 63
      %s233 = scalar_select %p232, %s231, 63
      %s234 = smul.addr %s233, 4
      %s235 = scalar_lea.vmem %s0, %s234
      %s236 = smul.u32 16, %s21
      %s237 = smul.u32 %s21, %s20
      %s238 = smul.u32 16, %s237
      %p239 = scmp.lt.s32.totalorder %s238, 63
      %s240 = scalar_select %p239, %s238, 63
      %s241 = smul.addr %s240, 4
      %s242 = scalar_lea.vmem %s5, %s241
      %s243 = smul.u32 %s21, %s20
      %s244 = smul.u32 16, %s243
      %v246 = vld [vmem:[%s235] sm:$0xf]
      %v247 = vld [vmem:[%s235 + $0x4] sm:$0xf]
      %v248 = vld [vmem:[%s235 + $0x8] sm:$0xf]
      %v249 = vld [vmem:[%s235 + $0xc] sm:$0xf]
      %v250 = vld [vmem:[%s235 + $0x10] sm:$0xf]
      %v251 = vld [vmem:[%s235 + $0x14] sm:$0xf]
      %v252 = vld [vmem:[%s235 + $0x18] sm:$0xf]
      %v253 = vld [vmem:[%s235 + $0x1c] sm:$0xf]
      %v254 = vld [vmem:[%s235 + $0x20] sm:$0xf]
      %v255 = vld [vmem:[%s235 + $0x24] sm:$0xf]
      %v256 = vld [vmem:[%s235 + $0x28] sm:$0xf]
      %v257 = vld [vmem:[%s235 + $0x2c] sm:$0xf]
      %v258 = vld [vmem:[%s235 + $0x30] sm:$0xf]
      %v259 = vld [vmem:[%s235 + $0x34] sm:$0xf]
      %v260 = vld [vmem:[%s235 + $0x38] sm:$0xf]
      %v261 = vld [vmem:[%s235 + $0x3c] sm:$0xf]
      %v262 = vld [vmem:[%s1] sm:$0xf]
      %v263 = vld [vmem:[%s1 + $0x4] sm:$0xf]
      %v264 = vld [vmem:[%s1 + $0x8] sm:$0xf]
      %v265 = vld [vmem:[%s1 + $0xc] sm:$0xf]
      %v266 = vld [vmem:[%s1 + $0x10] sm:$0x3]
      %v283 = vunpack.c.l.b16 %v246
      %v284 = vunpack.c.l.b16 %v247
      %v285 = vunpack.c.l.b16 %v248
      %v286 = vunpack.c.l.b16 %v249
      %v287 = vunpack.c.l.b16 %v250
      %v288 = vunpack.c.l.b16 %v251
      %v289 = vunpack.c.l.b16 %v252
      %v290 = vunpack.c.l.b16 %v253
      %v291 = vunpack.c.l.b16 %v254
      %v292 = vunpack.c.l.b16 %v255
      %v293 = vunpack.c.l.b16 %v256
      %v294 = vunpack.c.l.b16 %v257
      %v295 = vunpack.c.l.b16 %v258
      %v296 = vunpack.c.l.b16 %v259
      %v297 = vunpack.c.l.b16 %v260
      %v298 = vunpack.c.l.b16 %v261
      %v299 = vpack.c.b16 %v284, %v283
      %v300 = vpack.c.b16 %v286, %v285
      %v301 = vpack.c.b16 %v288, %v287
      %v302 = vpack.c.b16 %v290, %v289
      %v303 = vpack.c.b16 %v292, %v291
      %v304 = vpack.c.b16 %v294, %v293
      %v305 = vpack.c.b16 %v296, %v295
      %v306 = vpack.c.b16 %v298, %v297
      %v312 = vunpack.c.l.b16 %v262
      %v313 = vunpack.c.l.b16 %v263
      %v314 = vunpack.c.l.b16 %v264
      %v315 = vunpack.c.l.b16 %v265
      %v316 = vunpack.c.l.b16 %v266
      %v317 = vpack.c.b16 %v313, %v312
      %v318 = vpack.c.b16 %v315, %v314
      %v319 = vpack.c.b16 %v316, %v316
      %vm322 = vcmask 293888
      %v324 = vsel %vm322, %v299, 0
      %v327 = vsel %vm322, %v300, 0
      %v330 = vsel %vm322, %v301, 0
      %v333 = vsel %vm322, %v302, 0
      %v336 = vsel %vm322, %v303, 0
      %v339 = vsel %vm322, %v304, 0
      %v342 = vsel %vm322, %v305, 0
      %v345 = vsel %vm322, %v306, 0
      %vm347 = vcmask 1041408
      %v349 = vsel %vm347, %v319, 0
      %351 = vmatprep.subr.bf16.mxu0 0
      %352 = vmatpush1.bf16.msra.mxu0 0
      %353 = vmatprep.subr.bf16.mxu0 0
      %354 = vmatpush1.bf16.msra.mxu0 0
      %355 = vmatprep.subr.bf16.mxu0 0
      %356 = vmatpush1.bf16.msra.mxu0 0
      %357 = vmatprep.subr.bf16.mxu0 0
      %358 = vmatpush1.bf16.msra.mxu0 0
      %359 = vmatprep.subr.bf16.mxu0 0
      %360 = vmatpush1.bf16.msra.mxu0 0
      %361 = vmatprep.subr.bf16.mxu0 0
      %362 = vmatpush1.bf16.msra.mxu0 %v349
      %363 = vmatprep.subr.bf16.mxu0 0
      %364 = vmatpush1.bf16.msra.mxu0 %v318
      %365 = vmatprep.subr.bf16.mxu0 0
      %366 = vmatpush1.bf16.msra.mxu0 %v317
      %367 = vmatprep.subr.bf16.mxu0 0
      %368 = vmatpush2.bf16.msra.mxu0 0
      %369 = vmatprep.subr.bf16.mxu0 0
      %370 = vmatpush2.bf16.msra.mxu0 0
      %371 = vmatprep.subr.bf16.mxu0 0
      %372 = vmatpush2.bf16.msra.mxu0 0
      %373 = vmatprep.subr.bf16.mxu0 0
      %374 = vmatpush2.bf16.msra.mxu0 0
      %375 = vmatprep.subr.bf16.mxu0 0
      %376 = vmatpush2.bf16.msra.mxu0 0
      %377 = vmatprep.subr.bf16.mxu0 0
      %378 = vmatpush2.bf16.msra.mxu0 0
      %379 = vmatprep.subr.bf16.mxu0 0
      %380 = vmatpush2.bf16.msra.mxu0 0
      %381 = vmatprep.subr.bf16.mxu0 0
      %382 = vmatpush2.bf16.msra.mxu0 0
      %383 = vmatprep.mubr.bf16.mxu0 0
      %384 = vmatmul.mubr.bf16.gmra.mxu0 %v324
      %v385 = vpop.f32.mrf.mxu0
      %v386 = vadd.f32 0.0, %v385
      %v387 = vpop.f32.mrf.mxu0
      %v388 = vpop.f32.mrf.mxu0
      %v389 = vadd.f32 0.0, %v388
      %v390 = vpop.f32.mrf.mxu0
      %391 = vmatprep.mubr.bf16.mxu0 0
      %392 = vmatmul.mubr.bf16.gmra.mxu0 %v327
      %v393 = vpop.f32.mrf.mxu0
      %v394 = vadd.f32 0.0, %v393
      %v395 = vpop.f32.mrf.mxu0
      %v396 = vpop.f32.mrf.mxu0
      %v397 = vadd.f32 0.0, %v396
      %v398 = vpop.f32.mrf.mxu0
      %399 = vmatprep.mubr.bf16.mxu0 0
      %400 = vmatmul.mubr.bf16.gmra.mxu0 %v330
      %v401 = vpop.f32.mrf.mxu0
      %v402 = vadd.f32 0.0, %v401
      %v403 = vpop.f32.mrf.mxu0
      %v404 = vpop.f32.mrf.mxu0
      %v405 = vadd.f32 0.0, %v404
      %v406 = vpop.f32.mrf.mxu0
      %407 = vmatprep.mubr.bf16.mxu0 0
      %408 = vmatmul.mubr.bf16.gmra.mxu0 %v333
      %v409 = vpop.f32.mrf.mxu0
      %v410 = vadd.f32 0.0, %v409
      %v411 = vpop.f32.mrf.mxu0
      %v412 = vpop.f32.mrf.mxu0
      %v413 = vadd.f32 0.0, %v412
      %v414 = vpop.f32.mrf.mxu0
      %415 = vmatprep.mubr.bf16.mxu0 0
      %416 = vmatmul.mubr.bf16.gmra.mxu0 %v336
      %v417 = vpop.f32.mrf.mxu0
      %v418 = vadd.f32 0.0, %v417
      %v419 = vpop.f32.mrf.mxu0
      %v420 = vpop.f32.mrf.mxu0
      %v421 = vadd.f32 0.0, %v420
      %v422 = vpop.f32.mrf.mxu0
      %423 = vmatprep.mubr.bf16.mxu0 0
      %424 = vmatmul.mubr.bf16.gmra.mxu0 %v339
      %v425 = vpop.f32.mrf.mxu0
      %v426 = vadd.f32 0.0, %v425
      %v427 = vpop.f32.mrf.mxu0
      %v428 = vpop.f32.mrf.mxu0
      %v429 = vadd.f32 0.0, %v428
      %v430 = vpop.f32.mrf.mxu0
      %431 = vmatprep.mubr.bf16.mxu0 0
      %432 = vmatmul.mubr.bf16.gmra.mxu0 %v342
      %v433 = vpop.f32.mrf.mxu0
      %v434 = vadd.f32 0.0, %v433
      %v435 = vpop.f32.mrf.mxu0
      %v436 = vpop.f32.mrf.mxu0
      %v437 = vadd.f32 0.0, %v436
      %v438 = vpop.f32.mrf.mxu0
      %439 = vmatprep.mubr.bf16.mxu0 0
      %440 = vmatmul.mubr.bf16.gmra.mxu0 %v345
      %v441 = vpop.f32.mrf.mxu0
      %v442 = vadd.f32 0.0, %v441
      %v443 = vpop.f32.mrf.mxu0
      %v444 = vpop.f32.mrf.mxu0
      %v445 = vadd.f32 0.0, %v444
      %v446 = vpop.f32.mrf.mxu0
      %447 = vdwg.mxu0
      %p448 = scmp.eq.s32.totalorder %s20, 0
      %p449 = scmp.eq.s32.totalorder %s21, 0
      %p450 = pnand %p448, %p449
      %p451 = pneg %p450
      // Predicated region
      $region41: #{deconv_block_forward.1} parent=39 // pred_check
        _
      $region42: #{deconv_block_forward.1} parent=39 // pred_check_branch
        %453 = sbr.rel (%p450) target = $region44
      $region43: #{deconv_block_forward.1} parent=39 // pred_region
        %454 = vst [vmem:[#allocation2] sm:$0x1] 0.0
        %455 = vst [vmem:[#allocation3] sm:$0x1] 0.0
      $region44: #{deconv_block_forward.1} parent=39 // pred_fallthru
        _
      // Predicated region
      $region45: #{deconv_block_forward.1} parent=39 // pred_check
        %p456 = pneg %p448
      $region46: #{deconv_block_forward.1} parent=39 // pred_check_branch
        %458 = sbr.rel (%p456) target = $region48
      $region47: #{deconv_block_forward.1} parent=39 // pred_region
        %v459 = vld [vmem:[#allocation2] sm:$0x1]
        %v460 = vadd.f32 %v386, %v389
        %v461 = vadd.f32 %v460, %v394
        %v462 = vadd.f32 %v461, %v397
        %v463 = vadd.f32 %v462, %v402
        %v464 = vadd.f32 %v463, %v405
        %v465 = vadd.f32 %v464, %v410
        %v466 = vadd.f32 %v465, %v413
        %v467 = vadd.f32 %v466, %v418
        %v468 = vadd.f32 %v467, %v421
        %v469 = vadd.f32 %v468, %v426
        %v470 = vadd.f32 %v469, %v429
        %v471 = vadd.f32 %v470, %v434
        %v472 = vadd.f32 %v471, %v437
        %v473 = vadd.f32 %v472, %v442
        %v474 = vadd.f32 %v473, %v445
        %v475 = vrot.slane %v474, 4
        %v476 = vadd.f32 %v474, %v475
        %v477 = vrot.slane %v476, 2
        %v478 = vadd.f32 %v476, %v477
        %v479 = vrot.slane %v478, 1
        %v480 = vadd.f32 %v478, %v479
        %v481 = vadd.f32 %v459, %v480
        %482 = vst [vmem:[#allocation2] sm:$0x1] %v481
        %v483 = vld [vmem:[#allocation3] sm:$0x1]
        %v484 = vmul.f32 %v386, %v386
        %v485 = vmul.f32 %v389, %v389
        %v486 = vmul.f32 %v394, %v394
        %v487 = vmul.f32 %v397, %v397
        %v488 = vmul.f32 %v402, %v402
        %v489 = vmul.f32 %v405, %v405
        %v490 = vmul.f32 %v410, %v410
        %v491 = vmul.f32 %v413, %v413
        %v492 = vmul.f32 %v418, %v418
        %v493 = vmul.f32 %v421, %v421
        %v494 = vmul.f32 %v426, %v426
        %v495 = vmul.f32 %v429, %v429
        %v496 = vmul.f32 %v434, %v434
        %v497 = vmul.f32 %v437, %v437
        %v498 = vmul.f32 %v442, %v442
        %v499 = vmul.f32 %v445, %v445
        %v500 = vadd.f32 %v484, %v485
        %v501 = vadd.f32 %v500, %v486
        %v502 = vadd.f32 %v501, %v487
        %v503 = vadd.f32 %v502, %v488
        %v504 = vadd.f32 %v503, %v489
        %v505 = vadd.f32 %v504, %v490
        %v506 = vadd.f32 %v505, %v491
        %v507 = vadd.f32 %v506, %v492
        %v508 = vadd.f32 %v507, %v493
        %v509 = vadd.f32 %v508, %v494
        %v510 = vadd.f32 %v509, %v495
        %v511 = vadd.f32 %v510, %v496
        %v512 = vadd.f32 %v511, %v497
        %v513 = vadd.f32 %v512, %v498
        %v514 = vadd.f32 %v513, %v499
        %v515 = vrot.slane %v514, 4
        %v516 = vadd.f32 %v514, %v515
        %v517 = vrot.slane %v516, 2
        %v518 = vadd.f32 %v516, %v517
        %v519 = vrot.slane %v518, 1
        %v520 = vadd.f32 %v518, %v519
        %v521 = vadd.f32 %v483, %v520
        %522 = vst [vmem:[#allocation3] sm:$0x1] %v521
      $region48: #{deconv_block_forward.1} parent=39 // pred_fallthru
        _
      %p523 = scmp.eq.s32.totalorder %s20, 1
      %p524 = pnand %p523, %p449
      %p525 = pneg %p524
      // Predicated region
      $region49: #{deconv_block_forward.1} parent=39 // pred_check
        _
      $region50: #{deconv_block_forward.1} parent=39 // pred_check_branch
        %527 = sbr.rel (%p524) target = $region52
      $region51: #{deconv_block_forward.1} parent=39 // pred_region
        %v528 = vld [vmem:[#allocation2] sm:$0x1]
        %v529 = vld [vmem:[%s4] sm:$0xff]
        %v530 = vld [vmem:[%s4 + $0x8] sm:$0xff]
        %v531 = vld [vmem:[%s4 + $0x10] sm:$0xff]
        %v532 = vld [vmem:[%s4 + $0x18] sm:$0xff]
        %v533 = vld [vmem:[%s4 + $0x20] sm:$0xff]
        %v534 = vld [vmem:[%s4 + $0x28] sm:$0xff]
        %v535 = vld [vmem:[%s4 + $0x30] sm:$0xff]
        %v536 = vld [vmem:[%s4 + $0x38] sm:$0xff]
        %v537 = vld [vmem:[%s4 + $0x40] sm:$0xff]
        %v538 = vld [vmem:[%s4 + $0x48] sm:$0xff]
        %v539 = vld [vmem:[%s4 + $0x50] sm:$0xff]
        %v540 = vld [vmem:[%s4 + $0x58] sm:$0xff]
        %v541 = vld [vmem:[%s4 + $0x60] sm:$0xff]
        %v542 = vld [vmem:[%s4 + $0x68] sm:$0xff]
        %v543 = vld [vmem:[%s4 + $0x70] sm:$0xff]
        %v544 = vld [vmem:[%s4 + $0x78] sm:$0xff]
        %545 = vmatprep.subr.mxu0 0.0
        %546 = vmatpush1.msra.mxu0 %v544
        %547 = vmatprep.subr.mxu0 0.0
        %548 = vmatpush1.msra.mxu0 %v543
        %549 = vmatprep.subr.mxu0 0.0
        %550 = vmatpush1.msra.mxu0 %v542
        %551 = vmatprep.subr.mxu0 0.0
        %552 = vmatpush1.msra.mxu0 %v541
        %553 = vmatprep.subr.mxu0 0.0
        %554 = vmatpush1.msra.mxu0 %v540
        %555 = vmatprep.subr.mxu0 0.0
        %556 = vmatpush1.msra.mxu0 %v539
        %557 = vmatprep.subr.mxu0 0.0
        %558 = vmatpush1.msra.mxu0 %v538
        %559 = vmatprep.subr.mxu0 0.0
        %560 = vmatpush1.msra.mxu0 %v537
        %561 = vmatprep.subr.mxu0 0.0
        %562 = vmatpush1.msra.mxu0 %v536
        %563 = vmatprep.subr.mxu0 0.0
        %564 = vmatpush1.msra.mxu0 %v535
        %565 = vmatprep.subr.mxu0 0.0
        %566 = vmatpush1.msra.mxu0 %v534
        %567 = vmatprep.subr.mxu0 0.0
        %568 = vmatpush1.msra.mxu0 %v533
        %569 = vmatprep.subr.mxu0 0.0
        %570 = vmatpush1.msra.mxu0 %v532
        %571 = vmatprep.subr.mxu0 0.0
        %572 = vmatpush1.msra.mxu0 %v531
        %573 = vmatprep.subr.mxu0 0.0
        %574 = vmatpush1.msra.mxu0 %v530
        %575 = vmatprep.subr.mxu0 0.0
        %576 = vmatpush1.msra.mxu0 %v529
        %577 = vmatprep.subr.mxu0 0.0
        %578 = vmatpush2.msra.mxu0 0.0
        %579 = vmatprep.subr.mxu0 0.0
        %580 = vmatpush2.msra.mxu0 0.0
        %581 = vmatprep.subr.mxu0 0.0
        %582 = vmatpush2.msra.mxu0 0.0
        %583 = vmatprep.subr.mxu0 0.0
        %584 = vmatpush2.msra.mxu0 0.0
        %585 = vmatprep.subr.mxu0 0.0
        %586 = vmatpush2.msra.mxu0 0.0
        %587 = vmatprep.subr.mxu0 0.0
        %588 = vmatpush2.msra.mxu0 0.0
        %589 = vmatprep.subr.mxu0 0.0
        %590 = vmatpush2.msra.mxu0 0.0
        %591 = vmatprep.subr.mxu0 0.0
        %592 = vmatpush2.msra.mxu0 0.0
        %593 = vmatprep.subr.mxu0 0.0
        %594 = vmatpush2.msra.mxu0 0.0
        %595 = vmatprep.subr.mxu0 0.0
        %596 = vmatpush2.msra.mxu0 0.0
        %597 = vmatprep.subr.mxu0 0.0
        %598 = vmatpush2.msra.mxu0 0.0
        %599 = vmatprep.subr.mxu0 0.0
        %600 = vmatpush2.msra.mxu0 0.0
        %601 = vmatprep.subr.mxu0 0.0
        %602 = vmatpush2.msra.mxu0 0.0
        %603 = vmatprep.subr.mxu0 0.0
        %604 = vmatpush2.msra.mxu0 0.0
        %605 = vmatprep.subr.mxu0 0.0
        %606 = vmatpush2.msra.mxu0 0.0
        %607 = vmatprep.subr.mxu0 0.0
        %608 = vmatpush2.msra.mxu0 0.0
        %609 = vmatprep.mubr.f32.mxu0 0.0
        %610 = vmatmul.mubr.f32.gmra.mxu0 %v528
        %v611 = vpop.f32.mrf.mxu0
        %v612 = vadd.f32 0.0, %v611
        %v613 = vpop.f32.mrf.mxu0
        %614 = vdwg.mxu0
        %v615 = vld [vmem:[#allocation3] sm:$0x1]
        %616 = vmatprep.subr.mxu0 0.0
        %617 = vmatpush1.msra.mxu0 %v544
        %618 = vmatprep.subr.mxu0 0.0
        %619 = vmatpush1.msra.mxu0 %v543
        %620 = vmatprep.subr.mxu0 0.0
        %621 = vmatpush1.msra.mxu0 %v542
        %622 = vmatprep.subr.mxu0 0.0
        %623 = vmatpush1.msra.mxu0 %v541
        %624 = vmatprep.subr.mxu0 0.0
        %625 = vmatpush1.msra.mxu0 %v540
        %626 = vmatprep.subr.mxu0 0.0
        %627 = vmatpush1.msra.mxu0 %v539
        %628 = vmatprep.subr.mxu0 0.0
        %629 = vmatpush1.msra.mxu0 %v538
        %630 = vmatprep.subr.mxu0 0.0
        %631 = vmatpush1.msra.mxu0 %v537
        %632 = vmatprep.subr.mxu0 0.0
        %633 = vmatpush1.msra.mxu0 %v536
        %634 = vmatprep.subr.mxu0 0.0
        %635 = vmatpush1.msra.mxu0 %v535
        %636 = vmatprep.subr.mxu0 0.0
        %637 = vmatpush1.msra.mxu0 %v534
        %638 = vmatprep.subr.mxu0 0.0
        %639 = vmatpush1.msra.mxu0 %v533
        %640 = vmatprep.subr.mxu0 0.0
        %641 = vmatpush1.msra.mxu0 %v532
        %642 = vmatprep.subr.mxu0 0.0
        %643 = vmatpush1.msra.mxu0 %v531
        %644 = vmatprep.subr.mxu0 0.0
        %645 = vmatpush1.msra.mxu0 %v530
        %646 = vmatprep.subr.mxu0 0.0
        %647 = vmatpush1.msra.mxu0 %v529
        %648 = vmatprep.subr.mxu0 0.0
        %649 = vmatpush2.msra.mxu0 0.0
        %650 = vmatprep.subr.mxu0 0.0
        %651 = vmatpush2.msra.mxu0 0.0
        %652 = vmatprep.subr.mxu0 0.0
        %653 = vmatpush2.msra.mxu0 0.0
        %654 = vmatprep.subr.mxu0 0.0
        %655 = vmatpush2.msra.mxu0 0.0
        %656 = vmatprep.subr.mxu0 0.0
        %657 = vmatpush2.msra.mxu0 0.0
        %658 = vmatprep.subr.mxu0 0.0
        %659 = vmatpush2.msra.mxu0 0.0
        %660 = vmatprep.subr.mxu0 0.0
        %661 = vmatpush2.msra.mxu0 0.0
        %662 = vmatprep.subr.mxu0 0.0
        %663 = vmatpush2.msra.mxu0 0.0
        %664 = vmatprep.subr.mxu0 0.0
        %665 = vmatpush2.msra.mxu0 0.0
        %666 = vmatprep.subr.mxu0 0.0
        %667 = vmatpush2.msra.mxu0 0.0
        %668 = vmatprep.subr.mxu0 0.0
        %669 = vmatpush2.msra.mxu0 0.0
        %670 = vmatprep.subr.mxu0 0.0
        %671 = vmatpush2.msra.mxu0 0.0
        %672 = vmatprep.subr.mxu0 0.0
        %673 = vmatpush2.msra.mxu0 0.0
        %674 = vmatprep.subr.mxu0 0.0
        %675 = vmatpush2.msra.mxu0 0.0
        %676 = vmatprep.subr.mxu0 0.0
        %677 = vmatpush2.msra.mxu0 0.0
        %678 = vmatprep.subr.mxu0 0.0
        %679 = vmatpush2.msra.mxu0 0.0
        %680 = vmatprep.mubr.f32.mxu0 0.0
        %681 = vmatmul.mubr.f32.gmra.mxu0 %v615
        %v682 = vpop.f32.mrf.mxu0
        %v683 = vadd.f32 0.0, %v682
        %v684 = vpop.f32.mrf.mxu0
        %685 = vdwg.mxu0
        %v686 = vmul.f32 %v612, 0.00048828125
        %v687 = vmul.f32 %v683, 0.00048828125
        %v688 = vmul.f32 %v686, %v686
        %v689 = vsub.f32 %v687, %v688
        %v690 = vmax.f32 %v689, 0.0
        %v691 = vadd.f32 %v690, 1e-05
        %v692 = vrsqrt.pop %v691
        %v693 = vld [vmem:[%s2] sm:$0x1]
        %v694 = vmul.f32 %v693, %v692
        %695 = vst [vmem:[#allocation4] sm:$0x1] %v694
        %v696 = vld [vmem:[%s3] sm:$0x1]
        %v697 = vmul.f32 %v686, %v694
        %v698 = vsub.f32 %v696, %v697
        %699 = vst [vmem:[#allocation5] sm:$0x1] %v698
      $region52: #{deconv_block_forward.1} parent=39 // pred_fallthru
        _
      // Predicated region
      $region53: #{deconv_block_forward.1} parent=39 // pred_check
        %p700 = pneg %p523
      $region54: #{deconv_block_forward.1} parent=39 // pred_check_branch
        %702 = sbr.rel (%p700) target = $region56
      $region55: #{deconv_block_forward.1} parent=39 // pred_region
        %v703 = vld [vmem:[#allocation4] sm:$0x1]
        %v705 = vlaneseq
        %v706 = vshrl.u32 %v705, 7
        %v707 = vsub.s32 0, %v706
        %v708 = vrot.slane %v703, %v707
        %v710 = vmul.f32 %v386, %v708
        %v711 = vmul.f32 %v389, %v708
        %v712 = vmul.f32 %v394, %v708
        %v713 = vmul.f32 %v397, %v708
        %v714 = vmul.f32 %v402, %v708
        %v715 = vmul.f32 %v405, %v708
        %v716 = vmul.f32 %v410, %v708
        %v717 = vmul.f32 %v413, %v708
        %v718 = vmul.f32 %v418, %v708
        %v719 = vmul.f32 %v421, %v708
        %v720 = vmul.f32 %v426, %v708
        %v721 = vmul.f32 %v429, %v708
        %v722 = vmul.f32 %v434, %v708
        %v723 = vmul.f32 %v437, %v708
        %v724 = vmul.f32 %v442, %v708
        %v725 = vmul.f32 %v445, %v708
        %v726 = vld [vmem:[#allocation5] sm:$0x1]
        %v728 = vlaneseq
        %v729 = vshrl.u32 %v728, 7
        %v730 = vsub.s32 0, %v729
        %v731 = vrot.slane %v726, %v730
        %v733 = vadd.f32 %v710, %v731
        %v734 = vadd.f32 %v711, %v731
        %v735 = vadd.f32 %v712, %v731
        %v736 = vadd.f32 %v713, %v731
        %v737 = vadd.f32 %v714, %v731
        %v738 = vadd.f32 %v715, %v731
        %v739 = vadd.f32 %v716, %v731
        %v740 = vadd.f32 %v717, %v731
        %v741 = vadd.f32 %v718, %v731
        %v742 = vadd.f32 %v719, %v731
        %v743 = vadd.f32 %v720, %v731
        %v744 = vadd.f32 %v721, %v731
        %v745 = vadd.f32 %v722, %v731
        %v746 = vadd.f32 %v723, %v731
        %v747 = vadd.f32 %v724, %v731
        %v748 = vadd.f32 %v725, %v731
        %v749 = vmax.f32 %v733, 0.0
        %v750 = vmax.f32 %v734, 0.0
        %v751 = vmax.f32 %v735, 0.0
        %v752 = vmax.f32 %v736, 0.0
        %v753 = vmax.f32 %v737, 0.0
        %v754 = vmax.f32 %v738, 0.0
        %v755 = vmax.f32 %v739, 0.0
        %v756 = vmax.f32 %v740, 0.0
        %v757 = vmax.f32 %v741, 0.0
        %v758 = vmax.f32 %v742, 0.0
        %v759 = vmax.f32 %v743, 0.0
        %v760 = vmax.f32 %v744, 0.0
        %v761 = vmax.f32 %v745, 0.0
        %v762 = vmax.f32 %v746, 0.0
        %v763 = vmax.f32 %v747, 0.0
        %v764 = vmax.f32 %v748, 0.0
        %v765 = vpack.c.bf16 %v750, %v749
        %v766 = vpack.c.bf16 %v752, %v751
        %v767 = vpack.c.bf16 %v754, %v753
        %v768 = vpack.c.bf16 %v756, %v755
        %v769 = vpack.c.bf16 %v758, %v757
        %v770 = vpack.c.bf16 %v760, %v759
        %v771 = vpack.c.bf16 %v762, %v761
        %v772 = vpack.c.bf16 %v764, %v763
        %v781 = vunpack.c.l.b16 %v765
        %v782 = vunpack.c.h.b16 %v765
        %v783 = vunpack.c.l.b16 %v766
        %v784 = vunpack.c.h.b16 %v766
        %v785 = vunpack.c.l.b16 %v767
        %v786 = vunpack.c.h.b16 %v767
        %v787 = vunpack.c.l.b16 %v768
        %v788 = vunpack.c.h.b16 %v768
        %v789 = vunpack.c.l.b16 %v769
        %v790 = vunpack.c.h.b16 %v769
        %v791 = vunpack.c.l.b16 %v770
        %v792 = vunpack.c.h.b16 %v770
        %v793 = vunpack.c.l.b16 %v771
        %v794 = vunpack.c.h.b16 %v771
        %v795 = vunpack.c.l.b16 %v772
        %v796 = vunpack.c.h.b16 %v772
        %v797 = vpack.c.b16 %v781, %v781
        %v798 = vpack.c.b16 %v782, %v782
        %v799 = vpack.c.b16 %v783, %v783
        %v800 = vpack.c.b16 %v784, %v784
        %v801 = vpack.c.b16 %v785, %v785
        %v802 = vpack.c.b16 %v786, %v786
        %v803 = vpack.c.b16 %v787, %v787
        %v804 = vpack.c.b16 %v788, %v788
        %v805 = vpack.c.b16 %v789, %v789
        %v806 = vpack.c.b16 %v790, %v790
        %v807 = vpack.c.b16 %v791, %v791
        %v808 = vpack.c.b16 %v792, %v792
        %v809 = vpack.c.b16 %v793, %v793
        %v810 = vpack.c.b16 %v794, %v794
        %v811 = vpack.c.b16 %v795, %v795
        %v812 = vpack.c.b16 %v796, %v796
        %829 = vst [vmem:[%s242] sm:$0xf] %v797
        %830 = vst [vmem:[%s242 + $0x4] sm:$0xf] %v798
        %831 = vst [vmem:[%s242 + $0x8] sm:$0xf] %v799
        %832 = vst [vmem:[%s242 + $0xc] sm:$0xf] %v800
        %833 = vst [vmem:[%s242 + $0x10] sm:$0xf] %v801
        %834 = vst [vmem:[%s242 + $0x14] sm:$0xf] %v802
        %835 = vst [vmem:[%s242 + $0x18] sm:$0xf] %v803
        %836 = vst [vmem:[%s242 + $0x1c] sm:$0xf] %v804
        %837 = vst [vmem:[%s242 + $0x20] sm:$0xf] %v805
        %838 = vst [vmem:[%s242 + $0x24] sm:$0xf] %v806
        %839 = vst [vmem:[%s242 + $0x28] sm:$0xf] %v807
        %840 = vst [vmem:[%s242 + $0x2c] sm:$0xf] %v808
        %841 = vst [vmem:[%s242 + $0x30] sm:$0xf] %v809
        %842 = vst [vmem:[%s242 + $0x34] sm:$0xf] %v810
        %843 = vst [vmem:[%s242 + $0x38] sm:$0xf] %v811
        %844 = vst [vmem:[%s242 + $0x3c] sm:$0xf] %v812
      $region56: #{deconv_block_forward.1} parent=39 // pred_fallthru
        _
      %s845 = smul.u32 %s21, %s20
      %s846 = smul.u32 16, %s845
      %p847 = scmp.lt.s32.totalorder %s846, 63
      %s848 = scalar_select %p847, %s846, 63
      %s849 = smul.addr %s848, 4
      %s850 = scalar_lea.vmem %s5, %s849
      // Predicated region
      $region57: #{deconv_block_forward.1} parent=39 // pred_check
        %p851 = pneg %p158
      $region58: #{deconv_block_forward.1} parent=39 // pred_check_branch
        %853 = sbr.rel (%p851) target = $region60
      $region59: #{deconv_block_forward.1} parent=39 // pred_region
        %s854 = smul.u32 %s21, %s20
        %s855 = smul.u32 16, %s854
      $region60: #{deconv_block_forward.1} parent=39 // pred_fallthru
        _
    $region40: #{deconv_block_forward.1} parent=5 // pred_fallthru
      _
    %p856 = scmp.le.s32.totalorder 2, %s11
    // Predicated region
    $region61: #{deconv_block_forward.1} parent=5 // pred_check
      %p857 = pneg %p856
    $region62: #{deconv_block_forward.1} parent=5 // pred_check_branch
      %859 = sbr.rel (%p857) target = $region64
    $region63: #{deconv_block_forward.1} parent=5 // pred_region
      %s860 = ssub.s32 %s11, 2
      // Predicated region
      $region65: #{deconv_block_forward.1} parent=63 // pred_check
        %p861 = pneg %p164
      $region66: #{deconv_block_forward.1} parent=63 // pred_check_branch
        %863 = sbr.rel (%p861) target = $region68
      $region67: #{deconv_block_forward.1} parent=63 // pred_region
        %s864 = smul.u32 %s23, %s22
        %s865 = smul.u32 16, %s864
        %p866 = scmp.lt.s32.totalorder %s865, 63
        %s867 = scalar_select %p866, %s865, 63
        %s868 = smul.addr %s867, 4
        %s869 = scalar_lea.vmem %s5, %s868
      $region68: #{deconv_block_forward.1} parent=63 // pred_fallthru
        _
    $region64: #{deconv_block_forward.1} parent=5 // pred_fallthru
      _
  $region6: #{deconv_block_forward.1} parent=0 // loop_footer
    %s15 = sadd.s32 1, %s11
  $region7: #{deconv_block_forward.1} parent=0 // loop_footer_branch
    %10 = sbr.rel target = $region3
  $region8: #{deconv_block_forward.1} parent=0 // loop_exit
    _

</llo_original>
